<compile_context>
chip_gen: v6e
topology: v6e:2x2x1
jax: 0.10.0
libtpu: 0.0.40
codegen_flags: <defaults>
</compile_context>

<pallas_src>
import functools

import jax
import jax.numpy as jnp
from jax import lax
from jax.experimental import pallas as pl
from jax.experimental.pallas import tpu as pltpu

LN_EPS = 1e-5


def _round_up(x, m):
    return ((x + m - 1) // m) * m


def _pad2d(x, rows, cols):
    r, c = x.shape
    if r == rows and c == cols:
        return x
    return jnp.pad(x, ((0, rows - r), (0, cols - c)))


def _masked_layernorm(x, gamma, beta, d_actual, mask):
    """LayerNorm over the last axis; `d_actual` real lanes, rest are zero-padding."""
    s = jnp.sum(x, axis=-1, keepdims=True)
    mu = s / d_actual                       # padded lanes are zero -> sum is exact
    diff = x - mu
    if mask is not None:
        diff = diff * mask                  # keep padded lanes out of the variance
    var = jnp.sum(diff * diff, axis=-1, keepdims=True) / d_actual  # biased, like torch
    return diff * lax.rsqrt(var + LN_EPS) * gamma + beta


def ffn_kernel(x_ref, y_ref, w1_ref, b1_ref, w2_ref, b2_ref,
               g2_ref, be2_ref, g3_ref, be3_ref, o_ref,
               *, d_model, compute_dtype, mask_lanes):
    f32 = jnp.float32

    # residual add + LayerNorm2 (f32)
    t = x_ref[...].astype(f32) + y_ref[...].astype(f32)
    dp = t.shape[-1]
    if mask_lanes:
        lane = lax.broadcasted_iota(jnp.int32, (1, dp), 1)
        mask = (lane < d_model).astype(f32)
    else:
        mask = None
    h = _masked_layernorm(t, g2_ref[...].astype(f32), be2_ref[...].astype(f32),
                          d_model, mask)

    # linear1 -> relu -> linear2 on the MXU (bf16 operands, f32 accumulation).
    # TODO(synk): dropout layers are eval-mode identity (no training-mode RNG).
    a = jnp.dot(h.astype(compute_dtype), w1_ref[...],
                preferred_element_type=f32) + b1_ref[...].astype(f32)
    a = jnp.maximum(a, 0.0)
    z = jnp.dot(a.astype(compute_dtype), w2_ref[...],
                preferred_element_type=f32) + b2_ref[...].astype(f32)

    # residual add + LayerNorm3
    t2 = h + z
    o_ref[...] = _masked_layernorm(
        t2, g3_ref[...].astype(f32), be3_ref[...].astype(f32), d_model, mask
    ).astype(o_ref.dtype)


def ffn_forward(tgt, tgt2, params, *, token_tile=256, compute_dtype=jnp.bfloat16):
    """tgt, tgt2: [n_q, bs, d_model] -> [n_q, bs, d_model]."""
    n_q, bs, d_model = tgt.shape
    dff = params["w1"].shape[1]
    N = n_q * bs

    # Lane-dense padding of the feature dims; sublane-aligned token tile.
    dp = _round_up(d_model, 128)
    fp = _round_up(dff, 128)
    tm = min(_round_up(token_tile, 8), _round_up(N, 8))
    n_pad = _round_up(N, tm)

    x2d = _pad2d(tgt.reshape(N, d_model), n_pad, dp)
    y2d = _pad2d(tgt2.reshape(N, d_model), n_pad, dp)

    w1 = _pad2d(params["w1"], dp, fp).astype(compute_dtype)
    w2 = _pad2d(params["w2"], fp, dp).astype(compute_dtype)
    b1 = _pad2d(params["b1"], 1, fp)
    b2 = _pad2d(params["b2"], 1, dp)
    g2 = _pad2d(params["g2"], 1, dp)
    be2 = _pad2d(params["be2"], 1, dp)
    g3 = _pad2d(params["g3"], 1, dp)
    be3 = _pad2d(params["be3"], 1, dp)

    # Explicit VMEM budget: single-buffered weights + double-buffered token
    # tiles + f32 intermediates, with headroom.
    itm_c = jnp.dtype(compute_dtype).itemsize
    itm_io = jnp.dtype(tgt.dtype).itemsize
    need = (
        2 * dp * fp * itm_c            # w1 + w2 (single-buffered)
        + (fp + 5 * dp) * 4            # biases + LN params
        + 4 * tm * dp * itm_io         # x, y (double-buffered)
        + 2 * tm * dp * itm_io         # out (double-buffered)
        + tm * fp * 4                  # relu intermediate (f32)
        + 4 * tm * dp * 4              # f32 temporaries (t, h, z, t2)
    )
    vmem_limit = min(max(int(need * 1.4) + (4 << 20), 32 << 20), 112 << 20)

    kernel = functools.partial(
        ffn_kernel, d_model=d_model, compute_dtype=compute_dtype,
        mask_lanes=(dp != d_model))

    def build(weight_mode):
        extra = {} if weight_mode is None else {"pipeline_mode": weight_mode}

        def full(shape):
            return pl.BlockSpec(shape, lambda i: (0,) * len(shape), **extra)

        tok = pl.BlockSpec((tm, dp), lambda i: (i, 0))
        return pl.pallas_call(
            kernel,
            out_shape=jax.ShapeDtypeStruct((n_pad, dp), tgt.dtype),
            grid_spec=pltpu.PrefetchScalarGridSpec(
                num_scalar_prefetch=0,
                grid=(n_pad // tm,),
                in_specs=[
                    tok,                 # x
                    tok,                 # y
                    full((dp, fp)),      # w1
                    full((1, fp)),       # b1
                    full((fp, dp)),      # w2
                    full((1, dp)),       # b2
                    full((1, dp)),       # ln2 gamma
                    full((1, dp)),       # ln2 beta
                    full((1, dp)),       # ln3 gamma
                    full((1, dp)),       # ln3 beta
                ],
                out_specs=tok,
            ),
            compiler_params=pltpu.CompilerParams(
                dimension_semantics=("parallel",),
                vmem_limit_bytes=vmem_limit),
        )

    args = (x2d, y2d, w1, b1, w2, b2, g2, be2, g3, be3)
    try:
        # Constant index_map -> the weight blocks never change; single-buffer them.
        out = build(pl.Buffered(buffer_count=1))(*args)
    except Exception:
        # Fallback: default (double) buffering if this jax build rejects Buffered(1).
        out = build(None)(*args)

    return out[:N, :d_model].reshape(n_q, bs, d_model)


def ffn_reference(tgt, tgt2, params):
    """Plain-JAX reference mirroring the PyTorch forward (eval mode)."""
    def ln(x, g, b):
        mu = jnp.mean(x, axis=-1, keepdims=True)
        var = jnp.mean((x - mu) ** 2, axis=-1, keepdims=True)
        return (x - mu) / jnp.sqrt(var + LN_EPS) * g[0] + b[0]

    t = tgt + tgt2
    t = ln(t, params["g2"], params["be2"])
    z = jnp.maximum(t @ params["w1"] + params["b1"][0], 0.0) @ params["w2"] + params["b2"][0]
    t = t + z
    return ln(t, params["g3"], params["be3"])


def init_params(key, d_model, dff, dtype=jnp.float32):
    k1, k2, k3, k4 = jax.random.split(key, 4)
    s1 = 1.0 / jnp.sqrt(d_model)
    s2 = 1.0 / jnp.sqrt(dff)
    return {
        # linear1: (d_model -> dff); stored as [in, out] for x @ W
        "w1": jax.random.uniform(k1, (d_model, dff), dtype, -s1, s1),
        "b1": jax.random.uniform(k2, (1, dff), dtype, -s1, s1),
        # linear2: (dff -> d_model)
        "w2": jax.random.uniform(k3, (dff, d_model), dtype, -s2, s2),
        "b2": jax.random.uniform(k4, (1, d_model), dtype, -s2, s2),
        # LayerNorm affine params (torch default init: gamma=1, beta=0)
        "g2": jnp.ones((1, d_model), dtype),
        "be2": jnp.zeros((1, d_model), dtype),
        "g3": jnp.ones((1, d_model), dtype),
        "be3": jnp.zeros((1, d_model), dtype),
    }


if __name__ == "__main__":
    n_q, bs, d_model, dff = 8, 2, 32, 64
    key = jax.random.PRNGKey(0)
    kx, ky, kp = jax.random.split(key, 3)

    tgt = jax.random.normal(kx, (n_q, bs, d_model), jnp.float32)
    tgt2 = jax.random.normal(ky, (n_q, bs, d_model), jnp.float32)
    params = init_params(kp, d_model, dff)

    ref = ffn_reference(tgt, tgt2, params)

    # f32 matmul path: must match the reference tightly.
    out_f32 = jax.block_until_ready(
        ffn_forward(tgt, tgt2, params, compute_dtype=jnp.float32))
    assert out_f32.shape == (n_q, bs, d_model)
    assert jnp.allclose(out_f32, ref, atol=1e-5, rtol=1e-5), "f32 mismatch vs reference"

    # bf16 matmul path (production default): looser tolerance.
    out_bf16 = jax.block_until_ready(ffn_forward(tgt, tgt2, params))
    assert out_bf16.shape == (n_q, bs, d_model)
    assert jnp.allclose(out_bf16, ref, atol=5e-2, rtol=5e-2), "bf16 mismatch vs reference"

    print("KERNEL_OK")
</pallas_src>

<mosaic_0001>
module attributes {stable_mosaic.version = 11 : i64} {
  func.func @ffn_kernel(%arg0: i32, %arg1: memref<16x128xf32, #tpu.memory_space<vmem>>, %arg2: memref<16x128xf32, #tpu.memory_space<vmem>>, %arg3: memref<128x128xf32, #tpu.memory_space<vmem>>, %arg4: memref<1x128xf32, #tpu.memory_space<vmem>>, %arg5: memref<128x128xf32, #tpu.memory_space<vmem>>, %arg6: memref<1x128xf32, #tpu.memory_space<vmem>>, %arg7: memref<1x128xf32, #tpu.memory_space<vmem>>, %arg8: memref<1x128xf32, #tpu.memory_space<vmem>>, %arg9: memref<1x128xf32, #tpu.memory_space<vmem>>, %arg10: memref<1x128xf32, #tpu.memory_space<vmem>>, %arg11: memref<16x128xf32, #tpu.memory_space<vmem>>) attributes {dimension_semantics = [#tpu.dimension_semantics<parallel>], iteration_bounds = array<i64: 1>, scalar_prefetch = 0 : i64, scratch_operands = 0 : i64, tpu.core_type = #tpu.core_type<tc>, window_params = [{transform_indices = @transform_0, window_bounds = array<i64: 16, 128>}, {transform_indices = @transform_1, window_bounds = array<i64: 16, 128>}, {pipeline_mode = #tpu.pipeline_mode<synchronous>, transform_indices = @transform_2, window_bounds = array<i64: 128, 128>}, {pipeline_mode = #tpu.pipeline_mode<synchronous>, transform_indices = @transform_3, window_bounds = array<i64: 1, 128>}, {pipeline_mode = #tpu.pipeline_mode<synchronous>, transform_indices = @transform_4, window_bounds = array<i64: 128, 128>}, {pipeline_mode = #tpu.pipeline_mode<synchronous>, transform_indices = @transform_5, window_bounds = array<i64: 1, 128>}, {pipeline_mode = #tpu.pipeline_mode<synchronous>, transform_indices = @transform_6, window_bounds = array<i64: 1, 128>}, {pipeline_mode = #tpu.pipeline_mode<synchronous>, transform_indices = @transform_7, window_bounds = array<i64: 1, 128>}, {pipeline_mode = #tpu.pipeline_mode<synchronous>, transform_indices = @transform_8, window_bounds = array<i64: 1, 128>}, {pipeline_mode = #tpu.pipeline_mode<synchronous>, transform_indices = @transform_9, window_bounds = array<i64: 1, 128>}, {transform_indices = @transform_10, window_bounds = array<i64: 16, 128>}]} {
    %c0 = arith.constant 0 : index
    %c0_0 = arith.constant 0 : index
    %0 = vector.load %arg1[%c0, %c0_0] : memref<16x128xf32, #tpu.memory_space<vmem>>, vector<16x128xf32>
    %c0_1 = arith.constant 0 : index
    %c0_2 = arith.constant 0 : index
    %1 = vector.load %arg2[%c0_1, %c0_2] : memref<16x128xf32, #tpu.memory_space<vmem>>, vector<16x128xf32>
    %2 = arith.addf %0, %1 : vector<16x128xf32>
    %3 = tpu.iota {dimensions = array<i32: 1>} : vector<1x128xi32>
    %c32_i32 = arith.constant 32 : i32
    %4 = vector.broadcast %c32_i32 : i32 to vector<1x128xi32>
    %5 = arith.cmpi slt, %3, %4 : vector<1x128xi32>
    %6 = arith.extui %5 : vector<1x128xi1> to vector<1x128xi32>
    %7 = arith.sitofp %6 : vector<1x128xi32> to vector<1x128xf32>
    %c0_3 = arith.constant 0 : index
    %c0_4 = arith.constant 0 : index
    %8 = vector.load %arg7[%c0_3, %c0_4] : memref<1x128xf32, #tpu.memory_space<vmem>>, vector<1x128xf32>
    %c0_5 = arith.constant 0 : index
    %c0_6 = arith.constant 0 : index
    %9 = vector.load %arg8[%c0_5, %c0_6] : memref<1x128xf32, #tpu.memory_space<vmem>>, vector<1x128xf32>
    %cst = arith.constant dense<0.000000e+00> : vector<16xf32>
    %10 = vector.multi_reduction <add>, %2, %cst [1] : vector<16x128xf32> to vector<16xf32>
    %11 = vector.shape_cast %10 : vector<16xf32> to vector<16x1xf32>
    %cst_7 = arith.constant 3.200000e+01 : f32
    %12 = vector.broadcast %cst_7 : f32 to vector<16x1xf32>
    %13 = arith.divf %11, %12 : vector<16x1xf32>
    %14 = vector.broadcast %13 : vector<16x1xf32> to vector<16x128xf32>
    %15 = arith.subf %2, %14 : vector<16x128xf32>
    %16 = vector.broadcast %7 : vector<1x128xf32> to vector<16x128xf32>
    %17 = arith.mulf %15, %16 : vector<16x128xf32>
    %18 = arith.mulf %17, %17 : vector<16x128xf32>
    %cst_8 = arith.constant dense<0.000000e+00> : vector<16xf32>
    %19 = vector.multi_reduction <add>, %18, %cst_8 [1] : vector<16x128xf32> to vector<16xf32>
    %20 = vector.shape_cast %19 : vector<16xf32> to vector<16x1xf32>
    %cst_9 = arith.constant 3.200000e+01 : f32
    %21 = vector.broadcast %cst_9 : f32 to vector<16x1xf32>
    %22 = arith.divf %20, %21 : vector<16x1xf32>
    %cst_10 = arith.constant 9.99999974E-6 : f32
    %23 = vector.broadcast %cst_10 : f32 to vector<16x1xf32>
    %24 = arith.addf %22, %23 : vector<16x1xf32>
    %25 = math.rsqrt %24 : vector<16x1xf32>
    %26 = vector.broadcast %25 : vector<16x1xf32> to vector<16x128xf32>
    %27 = arith.mulf %17, %26 : vector<16x128xf32>
    %28 = vector.broadcast %8 : vector<1x128xf32> to vector<16x128xf32>
    %29 = arith.mulf %27, %28 : vector<16x128xf32>
    %30 = vector.broadcast %9 : vector<1x128xf32> to vector<16x128xf32>
    %31 = arith.addf %29, %30 : vector<16x128xf32>
    %c0_11 = arith.constant 0 : index
    %c0_12 = arith.constant 0 : index
    %32 = vector.load %arg3[%c0_11, %c0_12] : memref<128x128xf32, #tpu.memory_space<vmem>>, vector<128x128xf32>
    %cst_13 = arith.constant dense<0.000000e+00> : vector<16x128xf32>
    %33 = tpu.matmul %31, %32, %cst_13 {dimension_numbers = #tpu.dot_dimension_numbers<[1], [0], [0], [1], [0, 0, 1, 1], [], []>} : vector<16x128xf32>, vector<128x128xf32>, vector<16x128xf32> -> vector<16x128xf32>
    %c0_14 = arith.constant 0 : index
    %c0_15 = arith.constant 0 : index
    %34 = vector.load %arg4[%c0_14, %c0_15] : memref<1x128xf32, #tpu.memory_space<vmem>>, vector<1x128xf32>
    %35 = vector.broadcast %34 : vector<1x128xf32> to vector<16x128xf32>
    %36 = arith.addf %33, %35 : vector<16x128xf32>
    %cst_16 = arith.constant 0.000000e+00 : f32
    %37 = vector.broadcast %cst_16 : f32 to vector<16x128xf32>
    %38 = arith.maximumf %36, %37 : vector<16x128xf32>
    %c0_17 = arith.constant 0 : index
    %c0_18 = arith.constant 0 : index
    %39 = vector.load %arg5[%c0_17, %c0_18] : memref<128x128xf32, #tpu.memory_space<vmem>>, vector<128x128xf32>
    %cst_19 = arith.constant dense<0.000000e+00> : vector<16x128xf32>
    %40 = tpu.matmul %38, %39, %cst_19 {dimension_numbers = #tpu.dot_dimension_numbers<[1], [0], [0], [1], [0, 0, 1, 1], [], []>} : vector<16x128xf32>, vector<128x128xf32>, vector<16x128xf32> -> vector<16x128xf32>
    %c0_20 = arith.constant 0 : index
    %c0_21 = arith.constant 0 : index
    %41 = vector.load %arg6[%c0_20, %c0_21] : memref<1x128xf32, #tpu.memory_space<vmem>>, vector<1x128xf32>
    %42 = vector.broadcast %41 : vector<1x128xf32> to vector<16x128xf32>
    %43 = arith.addf %40, %42 : vector<16x128xf32>
    %44 = arith.addf %31, %43 : vector<16x128xf32>
    %c0_22 = arith.constant 0 : index
    %c0_23 = arith.constant 0 : index
    %45 = vector.load %arg9[%c0_22, %c0_23] : memref<1x128xf32, #tpu.memory_space<vmem>>, vector<1x128xf32>
    %c0_24 = arith.constant 0 : index
    %c0_25 = arith.constant 0 : index
    %46 = vector.load %arg10[%c0_24, %c0_25] : memref<1x128xf32, #tpu.memory_space<vmem>>, vector<1x128xf32>
    %cst_26 = arith.constant dense<0.000000e+00> : vector<16xf32>
    %47 = vector.multi_reduction <add>, %44, %cst_26 [1] : vector<16x128xf32> to vector<16xf32>
    %48 = vector.shape_cast %47 : vector<16xf32> to vector<16x1xf32>
    %cst_27 = arith.constant 3.200000e+01 : f32
    %49 = vector.broadcast %cst_27 : f32 to vector<16x1xf32>
    %50 = arith.divf %48, %49 : vector<16x1xf32>
    %51 = vector.broadcast %50 : vector<16x1xf32> to vector<16x128xf32>
    %52 = arith.subf %44, %51 : vector<16x128xf32>
    %53 = vector.broadcast %7 : vector<1x128xf32> to vector<16x128xf32>
    %54 = arith.mulf %52, %53 : vector<16x128xf32>
    %55 = arith.mulf %54, %54 : vector<16x128xf32>
    %cst_28 = arith.constant dense<0.000000e+00> : vector<16xf32>
    %56 = vector.multi_reduction <add>, %55, %cst_28 [1] : vector<16x128xf32> to vector<16xf32>
    %57 = vector.shape_cast %56 : vector<16xf32> to vector<16x1xf32>
    %cst_29 = arith.constant 3.200000e+01 : f32
    %58 = vector.broadcast %cst_29 : f32 to vector<16x1xf32>
    %59 = arith.divf %57, %58 : vector<16x1xf32>
    %cst_30 = arith.constant 9.99999974E-6 : f32
    %60 = vector.broadcast %cst_30 : f32 to vector<16x1xf32>
    %61 = arith.addf %59, %60 : vector<16x1xf32>
    %62 = math.rsqrt %61 : vector<16x1xf32>
    %63 = vector.broadcast %62 : vector<16x1xf32> to vector<16x128xf32>
    %64 = arith.mulf %54, %63 : vector<16x128xf32>
    %65 = vector.broadcast %45 : vector<1x128xf32> to vector<16x128xf32>
    %66 = arith.mulf %64, %65 : vector<16x128xf32>
    %67 = vector.broadcast %46 : vector<1x128xf32> to vector<16x128xf32>
    %68 = arith.addf %66, %67 : vector<16x128xf32>
    %c0_31 = arith.constant 0 : index
    %c0_32 = arith.constant 0 : index
    %69 = vector.load %arg11[%c0_31, %c0_32] : memref<16x128xf32, #tpu.memory_space<vmem>>, vector<16x128xf32>
    tpu.vector_store %arg11[%c0_31, %c0_32], %68 {strides = array<i32>} : memref<16x128xf32, #tpu.memory_space<vmem>>, vector<16x128xf32>,
    return
  }
  func.func @transform_0(%arg0: i32) -> (i32, i32) {
    %c0_i32 = arith.constant 0 : i32
    %c0_i32_0 = arith.constant 0 : i32
    return %arg0, %c0_i32 : i32, i32
  }
  func.func @transform_1(%arg0: i32) -> (i32, i32) {
    %c0_i32 = arith.constant 0 : i32
    %c0_i32_0 = arith.constant 0 : i32
    return %arg0, %c0_i32 : i32, i32
  }
  func.func @transform_2(%arg0: i32) -> (i32, i32) {
    %c0_i32 = arith.constant 0 : i32
    %c0_i32_0 = arith.constant 0 : i32
    %c0_i32_1 = arith.constant 0 : i32
    return %c0_i32, %c0_i32_0 : i32, i32
  }
  func.func @transform_3(%arg0: i32) -> (i32, i32) {
    %c0_i32 = arith.constant 0 : i32
    %c0_i32_0 = arith.constant 0 : i32
    %c0_i32_1 = arith.constant 0 : i32
    return %c0_i32, %c0_i32_0 : i32, i32
  }
  func.func @transform_4(%arg0: i32) -> (i32, i32) {
    %c0_i32 = arith.constant 0 : i32
    %c0_i32_0 = arith.constant 0 : i32
    %c0_i32_1 = arith.constant 0 : i32
    return %c0_i32, %c0_i32_0 : i32, i32
  }
  func.func @transform_5(%arg0: i32) -> (i32, i32) {
    %c0_i32 = arith.constant 0 : i32
    %c0_i32_0 = arith.constant 0 : i32
    %c0_i32_1 = arith.constant 0 : i32
    return %c0_i32, %c0_i32_0 : i32, i32
  }
  func.func @transform_6(%arg0: i32) -> (i32, i32) {
    %c0_i32 = arith.constant 0 : i32
    %c0_i32_0 = arith.constant 0 : i32
    %c0_i32_1 = arith.constant 0 : i32
    return %c0_i32, %c0_i32_0 : i32, i32
  }
  func.func @transform_7(%arg0: i32) -> (i32, i32) {
    %c0_i32 = arith.constant 0 : i32
    %c0_i32_0 = arith.constant 0 : i32
    %c0_i32_1 = arith.constant 0 : i32
    return %c0_i32, %c0_i32_0 : i32, i32
  }
  func.func @transform_8(%arg0: i32) -> (i32, i32) {
    %c0_i32 = arith.constant 0 : i32
    %c0_i32_0 = arith.constant 0 : i32
    %c0_i32_1 = arith.constant 0 : i32
    return %c0_i32, %c0_i32_0 : i32, i32
  }
  func.func @transform_9(%arg0: i32) -> (i32, i32) {
    %c0_i32 = arith.constant 0 : i32
    %c0_i32_0 = arith.constant 0 : i32
    %c0_i32_1 = arith.constant 0 : i32
    return %c0_i32, %c0_i32_0 : i32, i32
  }
  func.func @transform_10(%arg0: i32) -> (i32, i32) {
    %c0_i32 = arith.constant 0 : i32
    %c0_i32_0 = arith.constant 0 : i32
    return %arg0, %c0_i32 : i32, i32
  }
}

module attributes {stable_mosaic.version = 11 : i64} {
  func.func @ffn_kernel(%arg0: i32, %arg1: memref<16x128xf32, #tpu.memory_space<vmem>>, %arg2: memref<16x128xf32, #tpu.memory_space<vmem>>, %arg3: memref<128x128xf32, #tpu.memory_space<vmem>>, %arg4: memref<1x128xf32, #tpu.memory_space<vmem>>, %arg5: memref<128x128xf32, #tpu.memory_space<vmem>>, %arg6: memref<1x128xf32, #tpu.memory_space<vmem>>, %arg7: memref<1x128xf32, #tpu.memory_space<vmem>>, %arg8: memref<1x128xf32, #tpu.memory_space<vmem>>, %arg9: memref<1x128xf32, #tpu.memory_space<vmem>>, %arg10: memref<1x128xf32, #tpu.memory_space<vmem>>, %arg11: memref<16x128xf32, #tpu.memory_space<vmem>>) attributes {dimension_semantics = [#tpu.dimension_semantics<parallel>], iteration_bounds = array<i64: 1>, scalar_prefetch = 0 : i64, scratch_operands = 0 : i64, tpu.core_type = #tpu.core_type<tc>, window_params = [{transform_indices = @transform_0, window_bounds = array<i64: 16, 128>}, {transform_indices = @transform_1, window_bounds = array<i64: 16, 128>}, {pipeline_mode = #tpu.pipeline_mode<synchronous>, transform_indices = @transform_2, window_bounds = array<i64: 128, 128>}, {pipeline_mode = #tpu.pipeline_mode<synchronous>, transform_indices = @transform_3, window_bounds = array<i64: 1, 128>}, {pipeline_mode = #tpu.pipeline_mode<synchronous>, transform_indices = @transform_4, window_bounds = array<i64: 128, 128>}, {pipeline_mode = #tpu.pipeline_mode<synchronous>, transform_indices = @transform_5, window_bounds = array<i64: 1, 128>}, {pipeline_mode = #tpu.pipeline_mode<synchronous>, transform_indices = @transform_6, window_bounds = array<i64: 1, 128>}, {pipeline_mode = #tpu.pipeline_mode<synchronous>, transform_indices = @transform_7, window_bounds = array<i64: 1, 128>}, {pipeline_mode = #tpu.pipeline_mode<synchronous>, transform_indices = @transform_8, window_bounds = array<i64: 1, 128>}, {pipeline_mode = #tpu.pipeline_mode<synchronous>, transform_indices = @transform_9, window_bounds = array<i64: 1, 128>}, {transform_indices = @transform_10, window_bounds = array<i64: 16, 128>}]} {
    %c0 = arith.constant 0 : index
    %c0_0 = arith.constant 0 : index
    %0 = vector.load %arg1[%c0, %c0_0] : memref<16x128xf32, #tpu.memory_space<vmem>>, vector<16x128xf32>
    %c0_1 = arith.constant 0 : index
    %c0_2 = arith.constant 0 : index
    %1 = vector.load %arg2[%c0_1, %c0_2] : memref<16x128xf32, #tpu.memory_space<vmem>>, vector<16x128xf32>
    %2 = arith.addf %0, %1 : vector<16x128xf32>
    %3 = tpu.iota {dimensions = array<i32: 1>} : vector<1x128xi32>
    %c32_i32 = arith.constant 32 : i32
    %4 = vector.broadcast %c32_i32 : i32 to vector<1x128xi32>
    %5 = arith.cmpi slt, %3, %4 : vector<1x128xi32>
    %6 = arith.extui %5 : vector<1x128xi1> to vector<1x128xi32>
    %7 = arith.sitofp %6 : vector<1x128xi32> to vector<1x128xf32>
    %c0_3 = arith.constant 0 : index
    %c0_4 = arith.constant 0 : index
    %8 = vector.load %arg7[%c0_3, %c0_4] : memref<1x128xf32, #tpu.memory_space<vmem>>, vector<1x128xf32>
    %c0_5 = arith.constant 0 : index
    %c0_6 = arith.constant 0 : index
    %9 = vector.load %arg8[%c0_5, %c0_6] : memref<1x128xf32, #tpu.memory_space<vmem>>, vector<1x128xf32>
    %cst = arith.constant dense<0.000000e+00> : vector<16xf32>
    %10 = vector.multi_reduction <add>, %2, %cst [1] : vector<16x128xf32> to vector<16xf32>
    %11 = vector.shape_cast %10 : vector<16xf32> to vector<16x1xf32>
    %cst_7 = arith.constant 3.200000e+01 : f32
    %12 = vector.broadcast %cst_7 : f32 to vector<16x1xf32>
    %13 = arith.divf %11, %12 : vector<16x1xf32>
    %14 = vector.broadcast %13 : vector<16x1xf32> to vector<16x128xf32>
    %15 = arith.subf %2, %14 : vector<16x128xf32>
    %16 = vector.broadcast %7 : vector<1x128xf32> to vector<16x128xf32>
    %17 = arith.mulf %15, %16 : vector<16x128xf32>
    %18 = arith.mulf %17, %17 : vector<16x128xf32>
    %cst_8 = arith.constant dense<0.000000e+00> : vector<16xf32>
    %19 = vector.multi_reduction <add>, %18, %cst_8 [1] : vector<16x128xf32> to vector<16xf32>
    %20 = vector.shape_cast %19 : vector<16xf32> to vector<16x1xf32>
    %cst_9 = arith.constant 3.200000e+01 : f32
    %21 = vector.broadcast %cst_9 : f32 to vector<16x1xf32>
    %22 = arith.divf %20, %21 : vector<16x1xf32>
    %cst_10 = arith.constant 9.99999974E-6 : f32
    %23 = vector.broadcast %cst_10 : f32 to vector<16x1xf32>
    %24 = arith.addf %22, %23 : vector<16x1xf32>
    %25 = math.rsqrt %24 : vector<16x1xf32>
    %26 = vector.broadcast %25 : vector<16x1xf32> to vector<16x128xf32>
    %27 = arith.mulf %17, %26 : vector<16x128xf32>
    %28 = vector.broadcast %8 : vector<1x128xf32> to vector<16x128xf32>
    %29 = arith.mulf %27, %28 : vector<16x128xf32>
    %30 = vector.broadcast %9 : vector<1x128xf32> to vector<16x128xf32>
    %31 = arith.addf %29, %30 : vector<16x128xf32>
    %c0_11 = arith.constant 0 : index
    %c0_12 = arith.constant 0 : index
    %32 = vector.load %arg3[%c0_11, %c0_12] : memref<128x128xf32, #tpu.memory_space<vmem>>, vector<128x128xf32>
    %cst_13 = arith.constant dense<0.000000e+00> : vector<16x128xf32>
    %33 = tpu.matmul %31, %32, %cst_13 {dimension_numbers = #tpu.dot_dimension_numbers<[1], [0], [0], [1], [0, 0, 1, 1], [], []>} : vector<16x128xf32>, vector<128x128xf32>, vector<16x128xf32> -> vector<16x128xf32>
    %c0_14 = arith.constant 0 : index
    %c0_15 = arith.constant 0 : index
    %34 = vector.load %arg4[%c0_14, %c0_15] : memref<1x128xf32, #tpu.memory_space<vmem>>, vector<1x128xf32>
    %35 = vector.broadcast %34 : vector<1x128xf32> to vector<16x128xf32>
    %36 = arith.addf %33, %35 : vector<16x128xf32>
    %cst_16 = arith.constant 0.000000e+00 : f32
    %37 = vector.broadcast %cst_16 : f32 to vector<16x128xf32>
    %38 = arith.maximumf %36, %37 : vector<16x128xf32>
    %c0_17 = arith.constant 0 : index
    %c0_18 = arith.constant 0 : index
    %39 = vector.load %arg5[%c0_17, %c0_18] : memref<128x128xf32, #tpu.memory_space<vmem>>, vector<128x128xf32>
    %cst_19 = arith.constant dense<0.000000e+00> : vector<16x128xf32>
    %40 = tpu.matmul %38, %39, %cst_19 {dimension_numbers = #tpu.dot_dimension_numbers<[1], [0], [0], [1], [0, 0, 1, 1], [], []>} : vector<16x128xf32>, vector<128x128xf32>, vector<16x128xf32> -> vector<16x128xf32>
    %c0_20 = arith.constant 0 : index
    %c0_21 = arith.constant 0 : index
    %41 = vector.load %arg6[%c0_20, %c0_21] : memref<1x128xf32, #tpu.memory_space<vmem>>, vector<1x128xf32>
    %42 = vector.broadcast %41 : vector<1x128xf32> to vector<16x128xf32>
    %43 = arith.addf %40, %42 : vector<16x128xf32>
    %44 = arith.addf %31, %43 : vector<16x128xf32>
    %c0_22 = arith.constant 0 : index
    %c0_23 = arith.constant 0 : index
    %45 = vector.load %arg9[%c0_22, %c0_23] : memref<1x128xf32, #tpu.memory_space<vmem>>, vector<1x128xf32>
    %c0_24 = arith.constant 0 : index
    %c0_25 = arith.constant 0 : index
    %46 = vector.load %arg10[%c0_24, %c0_25] : memref<1x128xf32, #tpu.memory_space<vmem>>, vector<1x128xf32>
    %cst_26 = arith.constant dense<0.000000e+00> : vector<16xf32>
    %47 = vector.multi_reduction <add>, %44, %cst_26 [1] : vector<16x128xf32> to vector<16xf32>
    %48 = vector.shape_cast %47 : vector<16xf32> to vector<16x1xf32>
    %cst_27 = arith.constant 3.200000e+01 : f32
    %49 = vector.broadcast %cst_27 : f32 to vector<16x1xf32>
    %50 = arith.divf %48, %49 : vector<16x1xf32>
    %51 = vector.broadcast %50 : vector<16x1xf32> to vector<16x128xf32>
    %52 = arith.subf %44, %51 : vector<16x128xf32>
    %53 = vector.broadcast %7 : vector<1x128xf32> to vector<16x128xf32>
    %54 = arith.mulf %52, %53 : vector<16x128xf32>
    %55 = arith.mulf %54, %54 : vector<16x128xf32>
    %cst_28 = arith.constant dense<0.000000e+00> : vector<16xf32>
    %56 = vector.multi_reduction <add>, %55, %cst_28 [1] : vector<16x128xf32> to vector<16xf32>
    %57 = vector.shape_cast %56 : vector<16xf32> to vector<16x1xf32>
    %cst_29 = arith.constant 3.200000e+01 : f32
    %58 = vector.broadcast %cst_29 : f32 to vector<16x1xf32>
    %59 = arith.divf %57, %58 : vector<16x1xf32>
    %cst_30 = arith.constant 9.99999974E-6 : f32
    %60 = vector.broadcast %cst_30 : f32 to vector<16x1xf32>
    %61 = arith.addf %59, %60 : vector<16x1xf32>
    %62 = math.rsqrt %61 : vector<16x1xf32>
    %63 = vector.broadcast %62 : vector<16x1xf32> to vector<16x128xf32>
    %64 = arith.mulf %54, %63 : vector<16x128xf32>
    %65 = vector.broadcast %45 : vector<1x128xf32> to vector<16x128xf32>
    %66 = arith.mulf %64, %65 : vector<16x128xf32>
    %67 = vector.broadcast %46 : vector<1x128xf32> to vector<16x128xf32>
    %68 = arith.addf %66, %67 : vector<16x128xf32>
    %c0_31 = arith.constant 0 : index
    %c0_32 = arith.constant 0 : index
    %69 = vector.load %arg11[%c0_31, %c0_32] : memref<16x128xf32, #tpu.memory_space<vmem>>, vector<16x128xf32>
    tpu.vector_store %arg11[%c0_31, %c0_32], %68 {strides = array<i32>} : memref<16x128xf32, #tpu.memory_space<vmem>>, vector<16x128xf32>,
    return
  }
  func.func @transform_0(%arg0: i32) -> (i32, i32) {
    %c0_i32 = arith.constant 0 : i32
    %c0_i32_0 = arith.constant 0 : i32
    return %arg0, %c0_i32 : i32, i32
  }
  func.func @transform_1(%arg0: i32) -> (i32, i32) {
    %c0_i32 = arith.constant 0 : i32
    %c0_i32_0 = arith.constant 0 : i32
    return %arg0, %c0_i32 : i32, i32
  }
  func.func @transform_2(%arg0: i32) -> (i32, i32) {
    %c0_i32 = arith.constant 0 : i32
    %c0_i32_0 = arith.constant 0 : i32
    %c0_i32_1 = arith.constant 0 : i32
    return %c0_i32, %c0_i32_0 : i32, i32
  }
  func.func @transform_3(%arg0: i32) -> (i32, i32) {
    %c0_i32 = arith.constant 0 : i32
    %c0_i32_0 = arith.constant 0 : i32
    %c0_i32_1 = arith.constant 0 : i32
    return %c0_i32, %c0_i32_0 : i32, i32
  }
  func.func @transform_4(%arg0: i32) -> (i32, i32) {
    %c0_i32 = arith.constant 0 : i32
    %c0_i32_0 = arith.constant 0 : i32
    %c0_i32_1 = arith.constant 0 : i32
    return %c0_i32, %c0_i32_0 : i32, i32
  }
  func.func @transform_5(%arg0: i32) -> (i32, i32) {
    %c0_i32 = arith.constant 0 : i32
    %c0_i32_0 = arith.constant 0 : i32
    %c0_i32_1 = arith.constant 0 : i32
    return %c0_i32, %c0_i32_0 : i32, i32
  }
  func.func @transform_6(%arg0: i32) -> (i32, i32) {
    %c0_i32 = arith.constant 0 : i32
    %c0_i32_0 = arith.constant 0 : i32
    %c0_i32_1 = arith.constant 0 : i32
    return %c0_i32, %c0_i32_0 : i32, i32
  }
  func.func @transform_7(%arg0: i32) -> (i32, i32) {
    %c0_i32 = arith.constant 0 : i32
    %c0_i32_0 = arith.constant 0 : i32
    %c0_i32_1 = arith.constant 0 : i32
    return %c0_i32, %c0_i32_0 : i32, i32
  }
  func.func @transform_8(%arg0: i32) -> (i32, i32) {
    %c0_i32 = arith.constant 0 : i32
    %c0_i32_0 = arith.constant 0 : i32
    %c0_i32_1 = arith.constant 0 : i32
    return %c0_i32, %c0_i32_0 : i32, i32
  }
  func.func @transform_9(%arg0: i32) -> (i32, i32) {
    %c0_i32 = arith.constant 0 : i32
    %c0_i32_0 = arith.constant 0 : i32
    %c0_i32_1 = arith.constant 0 : i32
    return %c0_i32, %c0_i32_0 : i32, i32
  }
  func.func @transform_10(%arg0: i32) -> (i32, i32) {
    %c0_i32 = arith.constant 0 : i32
    %c0_i32_0 = arith.constant 0 : i32
    return %arg0, %c0_i32 : i32, i32
  }
}

</mosaic_0001>

<llo_original>
// kernel: tpu_custom_call.1
$region0: #{tpu_custom_call.1}
  #allocation0 [shape = 'u32[]', space=smem, size = 0x4, offset = 0x4, fixed_abs, tag = 'smem constant byte address 0x4 - core index']
  #allocation1 [shape = 'u32[144,128]{1,0:T(1,128)}', space=vmem, size = 0x12000, scoped, tag = 'internal scratch']
  %s0 = inlined_call_operand.hbm [shape: f32[16,128], index: 0, kind: input, shape index: {}]
  %s1 = inlined_call_operand.hbm [shape: f32[16,128], index: 1, kind: input, shape index: {}]
  %s2 = inlined_call_operand.hbm [shape: f32[128,128], index: 2, kind: input, shape index: {}]
  %s3 = inlined_call_operand.vmem [shape: f32[1,128], index: 3, kind: input, shape index: {}]
  %s4 = inlined_call_operand.hbm [shape: f32[128,128], index: 4, kind: input, shape index: {}]
  %s5 = inlined_call_operand.vmem [shape: f32[1,128], index: 5, kind: input, shape index: {}]
  %s6 = inlined_call_operand.vmem [shape: f32[1,128], index: 6, kind: input, shape index: {}]
  %s7 = inlined_call_operand.vmem [shape: f32[1,128], index: 7, kind: input, shape index: {}]
  %s8 = inlined_call_operand.vmem [shape: f32[1,128], index: 8, kind: input, shape index: {}]
  %s9 = inlined_call_operand.vmem [shape: f32[1,128], index: 9, kind: input, shape index: {}]
  %s10 = inlined_call_operand.hbm [shape: f32[16,128], index: 10, kind: output, shape index: {}]
  %s11 = sld [smem:[#allocation0]]
  $region66: #{tpu_custom_call.1} parent=0
    _
  %s13 = ssub.s32 1, %s11
  %s14 = scalar_select 0, %s13, %s11
  $region1: #{tpu_custom_call.1} parent=0
    #allocation2 [shape = 'u8[8192]{0}', space=vmem, size = 0x2000, scoped, tag = 'input window, operand 0, single buffered']
    #allocation3 [shape = 's32[1]{0}', space=sflag, size = 0x4, scoped, tag = 'scoped memory for tpu_custom_call.1']
    #allocation4 [shape = 's32[1]{0}', space=sflag, size = 0x4, scoped, tag = 'scoped memory for tpu_custom_call.1']
    #allocation5 [shape = 'u8[8192]{0}', space=vmem, size = 0x2000, scoped, tag = 'input window, operand 1, single buffered']
    #allocation6 [shape = 's32[1]{0}', space=sflag, size = 0x4, scoped, tag = 'scoped memory for tpu_custom_call.1']
    #allocation7 [shape = 'u8[65536]{0}', space=vmem, size = 0x10000, scoped, tag = 'input window, operand 2, single buffered']
    #allocation8 [shape = 'u8[65536]{0}', space=vmem, size = 0x10000, scoped, tag = 'input window, operand 4, single buffered']
    #allocation9 [shape = 's32[1]{0}', space=sflag, size = 0x4, scoped, tag = 'scoped memory for tpu_custom_call.1']
    #allocation10 [shape = 'u8[8192]{0}', space=vmem, size = 0x2000, scoped, tag = 'output window, operand 0, single buffered']
    %15 = vsyncpa [#allocation3], 0
    %16 = vsyncpa [#allocation6], 0
    %17 = vsyncpa [#allocation9], 0
    %18 = vsyncpa [#allocation4], 0
    // Predicated region
    $region2: #{tpu_custom_call.1} parent=1 // pred_check
      _
    $region3: #{tpu_custom_call.1} parent=1 // pred_check_branch
      %20 = sbr.rel (0) target = $region5
    $region4: #{tpu_custom_call.1} parent=1 // pred_region
      %s22 = ssub.s32 256, 256
      %23 = vsyncadd [#allocation3], %s22
      %s24 = sshll.u32 [#allocation2], 4
      %s25 = int_to_ptr.vmem [resolvable:$true] %s24
      %30 = dma.hbm_to_vmem [thread:$0]  %s0, 256, %s25, [#allocation3], 128, 128, 8
    $region5: #{tpu_custom_call.1} parent=1 // pred_fallthru
      _
    // Predicated region
    $region6: #{tpu_custom_call.1} parent=1 // pred_check
      _
    $region7: #{tpu_custom_call.1} parent=1 // pred_check_branch
      %32 = sbr.rel (0) target = $region9
    $region8: #{tpu_custom_call.1} parent=1 // pred_region
      %s34 = ssub.s32 256, 256
      %35 = vsyncadd [#allocation6], %s34
      %s36 = sshll.u32 [#allocation5], 4
      %s37 = int_to_ptr.vmem [resolvable:$true] %s36
      %42 = dma.hbm_to_vmem [thread:$0]  %s1, 256, %s37, [#allocation6], 128, 128, 8
    $region9: #{tpu_custom_call.1} parent=1 // pred_fallthru
      _
    // Predicated region
    $region10: #{tpu_custom_call.1} parent=1 // pred_check
      _
    $region11: #{tpu_custom_call.1} parent=1 // pred_check_branch
      %44 = sbr.rel (0) target = $region13
    $region12: #{tpu_custom_call.1} parent=1 // pred_region
      %s46 = ssub.s32 2048, 2048
      %47 = vsyncadd [#allocation6], %s46
      %s48 = sshll.u32 [#allocation7], 4
      %s49 = int_to_ptr.vmem [resolvable:$true] %s48
      %54 = dma.hbm_to_vmem [thread:$0]  %s2, 2048, %s49, [#allocation6], 128, 128, 8
    $region13: #{tpu_custom_call.1} parent=1 // pred_fallthru
      _
    // Predicated region
    $region14: #{tpu_custom_call.1} parent=1 // pred_check
      _
    $region15: #{tpu_custom_call.1} parent=1 // pred_check_branch
      %56 = sbr.rel (0) target = $region17
    $region16: #{tpu_custom_call.1} parent=1 // pred_region
      _
    $region17: #{tpu_custom_call.1} parent=1 // pred_fallthru
      _
    // Predicated region
    $region18: #{tpu_custom_call.1} parent=1 // pred_check
      _
    $region19: #{tpu_custom_call.1} parent=1 // pred_check_branch
      %58 = sbr.rel (0) target = $region21
    $region20: #{tpu_custom_call.1} parent=1 // pred_region
      %s60 = ssub.s32 2048, 2048
      %61 = vsyncadd [#allocation9], %s60
      %s62 = sshll.u32 [#allocation8], 4
      %s63 = int_to_ptr.vmem [resolvable:$true] %s62
      %68 = dma.hbm_to_vmem [thread:$0]  %s4, 2048, %s63, [#allocation9], 128, 128, 8
    $region21: #{tpu_custom_call.1} parent=1 // pred_fallthru
      _
    // Predicated region
    $region22: #{tpu_custom_call.1} parent=1 // pred_check
      _
    $region23: #{tpu_custom_call.1} parent=1 // pred_check_branch
      %70 = sbr.rel (0) target = $region25
    $region24: #{tpu_custom_call.1} parent=1 // pred_region
      _
    $region25: #{tpu_custom_call.1} parent=1 // pred_fallthru
      _
    // Predicated region
    $region26: #{tpu_custom_call.1} parent=1 // pred_check
      _
    $region27: #{tpu_custom_call.1} parent=1 // pred_check_branch
      %72 = sbr.rel (0) target = $region29
    $region28: #{tpu_custom_call.1} parent=1 // pred_region
      _
    $region29: #{tpu_custom_call.1} parent=1 // pred_fallthru
      _
    // Predicated region
    $region30: #{tpu_custom_call.1} parent=1 // pred_check
      _
    $region31: #{tpu_custom_call.1} parent=1 // pred_check_branch
      %74 = sbr.rel (0) target = $region33
    $region32: #{tpu_custom_call.1} parent=1 // pred_region
      _
    $region33: #{tpu_custom_call.1} parent=1 // pred_fallthru
      _
    // Predicated region
    $region34: #{tpu_custom_call.1} parent=1 // pred_check
      _
    $region35: #{tpu_custom_call.1} parent=1 // pred_check_branch
      %76 = sbr.rel (0) target = $region37
    $region36: #{tpu_custom_call.1} parent=1 // pred_region
      _
    $region37: #{tpu_custom_call.1} parent=1 // pred_fallthru
      _
    // Predicated region
    $region38: #{tpu_custom_call.1} parent=1 // pred_check
      _
    $region39: #{tpu_custom_call.1} parent=1 // pred_check_branch
      %78 = sbr.rel (0) target = $region41
    $region40: #{tpu_custom_call.1} parent=1 // pred_region
      _
    $region41: #{tpu_custom_call.1} parent=1 // pred_fallthru
      _
    // Predicated region
    $region42: #{tpu_custom_call.1} parent=1 // pred_check
      _
    $region43: #{tpu_custom_call.1} parent=1 // pred_check_branch
      %80 = sbr.rel (0) target = $region45
    $region44: #{tpu_custom_call.1} parent=1 // pred_region
      %81 = dma.done [#allocation3], 256
    $region45: #{tpu_custom_call.1} parent=1 // pred_fallthru
      _
    // Predicated region
    $region46: #{tpu_custom_call.1} parent=1 // pred_check
      _
    $region47: #{tpu_custom_call.1} parent=1 // pred_check_branch
      %83 = sbr.rel (0) target = $region49
    $region48: #{tpu_custom_call.1} parent=1 // pred_region
      %84 = dma.done [#allocation6], 256
    $region49: #{tpu_custom_call.1} parent=1 // pred_fallthru
      _
    // Predicated region
    $region50: #{tpu_custom_call.1} parent=1 // pred_check
      _
    $region51: #{tpu_custom_call.1} parent=1 // pred_check_branch
      %86 = sbr.rel (0) target = $region53
    $region52: #{tpu_custom_call.1} parent=1 // pred_region
      %87 = dma.done [#allocation6], 2048
    $region53: #{tpu_custom_call.1} parent=1 // pred_fallthru
      _
    // Predicated region
    $region54: #{tpu_custom_call.1} parent=1 // pred_check
      _
    $region55: #{tpu_custom_call.1} parent=1 // pred_check_branch
      %89 = sbr.rel (0) target = $region57
    $region56: #{tpu_custom_call.1} parent=1 // pred_region
      %90 = dma.done [#allocation9], 2048
    $region57: #{tpu_custom_call.1} parent=1 // pred_fallthru
      _
    %v91 = vld [vmem:[#allocation2] sm:$0xff]
    %v92 = vld [vmem:[#allocation2 + $0x8] sm:$0xff]
    %v93 = vld [vmem:[#allocation5] sm:$0xff]
    %v94 = vld [vmem:[#allocation5 + $0x8] sm:$0xff]
    %v95 = vadd.f32 %v91, %v93
    %v96 = vadd.f32 %v92, %v94
    %v97 = vlaneseq
    %v98 = vand.u32 %v97, 127
    %vm99 = vcmp.lt.s32.totalorder %v98, 32
    %v100 = vsel %vm99, 1, 0
    %v101 = vcvt.s32.f32 %v100
    %v102 = vld [vmem:[%s6] sm:$0x1]
    %v103 = vld [vmem:[%s7] sm:$0x1]
    %104 = vadd.xlane.f32.xlu0 %v95
    %v105 = vpop.xlane.xlu0 %104
    %106 = vadd.xlane.f32.xlu0 %v96
    %v107 = vpop.xlane.xlu0 %106
    %v108 = vrcp.pop 32.0
    %v109 = vmul.f32 %v105, %v108
    %v110 = vmul.f32 %v107, %v108
    %v111 = vsub.f32 %v95, %v109
    %v112 = vsub.f32 %v96, %v110
    %v113 = vmul.f32 %v111, %v101
    %v114 = vmul.f32 %v112, %v101
    %v115 = vmul.f32 %v113, %v113
    %v116 = vmul.f32 %v114, %v114
    %117 = vadd.xlane.f32.xlu0 %v115
    %v118 = vpop.xlane.xlu0 %117
    %119 = vadd.xlane.f32.xlu0 %v116
    %v120 = vpop.xlane.xlu0 %119
    %v121 = vmul.f32 %v118, %v108
    %v122 = vmul.f32 %v120, %v108
    %v123 = vadd.f32 %v121, 1e-05
    %v124 = vadd.f32 %v122, 1e-05
    %v125 = vrsqrt.pop %v123
    %v126 = vrsqrt.pop %v124
    %v127 = vmul.f32 %v113, %v125
    %v128 = vmul.f32 %v114, %v126
    %v130 = vlaneseq
    %v131 = vshrl.u32 %v130, 7
    %v132 = vsub.s32 0, %v131
    %v133 = vrot.slane %v102, %v132
    %v135 = vmul.f32 %v127, %v133
    %v136 = vmul.f32 %v128, %v133
    %v138 = vlaneseq
    %v139 = vshrl.u32 %v138, 7
    %v140 = vsub.s32 0, %v139
    %v141 = vrot.slane %v103, %v140
    %v143 = vadd.f32 %v135, %v141
    %v144 = vadd.f32 %v136, %v141
    %v145 = vld [vmem:[#allocation7] sm:$0xff]
    %v146 = vld [vmem:[#allocation7 + $0x8] sm:$0xff]
    %v147 = vld [vmem:[#allocation7 + $0x10] sm:$0xff]
    %v148 = vld [vmem:[#allocation7 + $0x18] sm:$0xff]
    %v149 = vld [vmem:[#allocation7 + $0x20] sm:$0xff]
    %v150 = vld [vmem:[#allocation7 + $0x28] sm:$0xff]
    %v151 = vld [vmem:[#allocation7 + $0x30] sm:$0xff]
    %v152 = vld [vmem:[#allocation7 + $0x38] sm:$0xff]
    %v153 = vld [vmem:[#allocation7 + $0x40] sm:$0xff]
    %v154 = vld [vmem:[#allocation7 + $0x48] sm:$0xff]
    %v155 = vld [vmem:[#allocation7 + $0x50] sm:$0xff]
    %v156 = vld [vmem:[#allocation7 + $0x58] sm:$0xff]
    %v157 = vld [vmem:[#allocation7 + $0x60] sm:$0xff]
    %v158 = vld [vmem:[#allocation7 + $0x68] sm:$0xff]
    %v159 = vld [vmem:[#allocation7 + $0x70] sm:$0xff]
    %v160 = vld [vmem:[#allocation7 + $0x78] sm:$0xff]
    %v161 = vld [vmem:[%s3] sm:$0x1]
    %v163 = vlaneseq
    %v164 = vshrl.u32 %v163, 7
    %v165 = vsub.s32 0, %v164
    %v166 = vrot.slane %v161, %v165
    %168 = vmatprep.subr.mxu0 0.0
    %169 = vmatpush1.msra.mxu0 %v160
    %170 = vmatprep.subr.mxu0 0.0
    %171 = vmatpush1.msra.mxu0 %v159
    %172 = vmatprep.subr.mxu0 0.0
    %173 = vmatpush1.msra.mxu0 %v158
    %174 = vmatprep.subr.mxu0 0.0
    %175 = vmatpush1.msra.mxu0 %v157
    %176 = vmatprep.subr.mxu0 0.0
    %177 = vmatpush1.msra.mxu0 %v156
    %178 = vmatprep.subr.mxu0 0.0
    %179 = vmatpush1.msra.mxu0 %v155
    %180 = vmatprep.subr.mxu0 0.0
    %181 = vmatpush1.msra.mxu0 %v154
    %182 = vmatprep.subr.mxu0 0.0
    %183 = vmatpush1.msra.mxu0 %v153
    %184 = vmatprep.subr.mxu0 0.0
    %185 = vmatpush1.msra.mxu0 %v152
    %186 = vmatprep.subr.mxu0 0.0
    %187 = vmatpush1.msra.mxu0 %v151
    %188 = vmatprep.subr.mxu0 0.0
    %189 = vmatpush1.msra.mxu0 %v150
    %190 = vmatprep.subr.mxu0 0.0
    %191 = vmatpush1.msra.mxu0 %v149
    %192 = vmatprep.subr.mxu0 0.0
    %193 = vmatpush1.msra.mxu0 %v148
    %194 = vmatprep.subr.mxu0 0.0
    %195 = vmatpush1.msra.mxu0 %v147
    %196 = vmatprep.subr.mxu0 0.0
    %197 = vmatpush1.msra.mxu0 %v146
    %198 = vmatprep.subr.mxu0 0.0
    %199 = vmatpush1.msra.mxu0 %v145
    %200 = vmatprep.subr.mxu0 0.0
    %201 = vmatpush2.msra.mxu0 0.0
    %202 = vmatprep.subr.mxu0 0.0
    %203 = vmatpush2.msra.mxu0 0.0
    %204 = vmatprep.subr.mxu0 0.0
    %205 = vmatpush2.msra.mxu0 0.0
    %206 = vmatprep.subr.mxu0 0.0
    %207 = vmatpush2.msra.mxu0 0.0
    %208 = vmatprep.subr.mxu0 0.0
    %209 = vmatpush2.msra.mxu0 0.0
    %210 = vmatprep.subr.mxu0 0.0
    %211 = vmatpush2.msra.mxu0 0.0
    %212 = vmatprep.subr.mxu0 0.0
    %213 = vmatpush2.msra.mxu0 0.0
    %214 = vmatprep.subr.mxu0 0.0
    %215 = vmatpush2.msra.mxu0 0.0
    %216 = vmatprep.subr.mxu0 0.0
    %217 = vmatpush2.msra.mxu0 0.0
    %218 = vmatprep.subr.mxu0 0.0
    %219 = vmatpush2.msra.mxu0 0.0
    %220 = vmatprep.subr.mxu0 0.0
    %221 = vmatpush2.msra.mxu0 0.0
    %222 = vmatprep.subr.mxu0 0.0
    %223 = vmatpush2.msra.mxu0 0.0
    %224 = vmatprep.subr.mxu0 0.0
    %225 = vmatpush2.msra.mxu0 0.0
    %226 = vmatprep.subr.mxu0 0.0
    %227 = vmatpush2.msra.mxu0 0.0
    %228 = vmatprep.subr.mxu0 0.0
    %229 = vmatpush2.msra.mxu0 0.0
    %230 = vmatprep.subr.mxu0 0.0
    %231 = vmatpush2.msra.mxu0 0.0
    %232 = vmatprep.mubr.f32.mxu0 0.0
    %233 = vmatmul.mubr.f32.gmra.mxu0 %v143
    %v234 = vpop.f32.mrf.mxu0
    %v235 = vadd.f32 %v166, %v234
    %v236 = vpop.f32.mrf.mxu0
    %237 = vmatprep.mubr.f32.mxu0 0.0
    %238 = vmatmul.mubr.f32.gmra.mxu0 %v144
    %v239 = vpop.f32.mrf.mxu0
    %v240 = vadd.f32 %v166, %v239
    %v241 = vpop.f32.mrf.mxu0
    %242 = vdwg.mxu0
    %v243 = vmax.f32 %v235, 0.0
    %v244 = vmax.f32 %v240, 0.0
    %v245 = vld [vmem:[#allocation8] sm:$0xff]
    %v246 = vld [vmem:[#allocation8 + $0x8] sm:$0xff]
    %v247 = vld [vmem:[#allocation8 + $0x10] sm:$0xff]
    %v248 = vld [vmem:[#allocation8 + $0x18] sm:$0xff]
    %v249 = vld [vmem:[#allocation8 + $0x20] sm:$0xff]
    %v250 = vld [vmem:[#allocation8 + $0x28] sm:$0xff]
    %v251 = vld [vmem:[#allocation8 + $0x30] sm:$0xff]
    %v252 = vld [vmem:[#allocation8 + $0x38] sm:$0xff]
    %v253 = vld [vmem:[#allocation8 + $0x40] sm:$0xff]
    %v254 = vld [vmem:[#allocation8 + $0x48] sm:$0xff]
    %v255 = vld [vmem:[#allocation8 + $0x50] sm:$0xff]
    %v256 = vld [vmem:[#allocation8 + $0x58] sm:$0xff]
    %v257 = vld [vmem:[#allocation8 + $0x60] sm:$0xff]
    %v258 = vld [vmem:[#allocation8 + $0x68] sm:$0xff]
    %v259 = vld [vmem:[#allocation8 + $0x70] sm:$0xff]
    %v260 = vld [vmem:[#allocation8 + $0x78] sm:$0xff]
    %v261 = vld [vmem:[%s5] sm:$0x1]
    %v263 = vlaneseq
    %v264 = vshrl.u32 %v263, 7
    %v265 = vsub.s32 0, %v264
    %v266 = vrot.slane %v261, %v265
    %268 = vmatprep.subr.mxu0 0.0
    %269 = vmatpush1.msra.mxu0 %v260
    %270 = vmatprep.subr.mxu0 0.0
    %271 = vmatpush1.msra.mxu0 %v259
    %272 = vmatprep.subr.mxu0 0.0
    %273 = vmatpush1.msra.mxu0 %v258
    %274 = vmatprep.subr.mxu0 0.0
    %275 = vmatpush1.msra.mxu0 %v257
    %276 = vmatprep.subr.mxu0 0.0
    %277 = vmatpush1.msra.mxu0 %v256
    %278 = vmatprep.subr.mxu0 0.0
    %279 = vmatpush1.msra.mxu0 %v255
    %280 = vmatprep.subr.mxu0 0.0
    %281 = vmatpush1.msra.mxu0 %v254
    %282 = vmatprep.subr.mxu0 0.0
    %283 = vmatpush1.msra.mxu0 %v253
    %284 = vmatprep.subr.mxu0 0.0
    %285 = vmatpush1.msra.mxu0 %v252
    %286 = vmatprep.subr.mxu0 0.0
    %287 = vmatpush1.msra.mxu0 %v251
    %288 = vmatprep.subr.mxu0 0.0
    %289 = vmatpush1.msra.mxu0 %v250
    %290 = vmatprep.subr.mxu0 0.0
    %291 = vmatpush1.msra.mxu0 %v249
    %292 = vmatprep.subr.mxu0 0.0
    %293 = vmatpush1.msra.mxu0 %v248
    %294 = vmatprep.subr.mxu0 0.0
    %295 = vmatpush1.msra.mxu0 %v247
    %296 = vmatprep.subr.mxu0 0.0
    %297 = vmatpush1.msra.mxu0 %v246
    %298 = vmatprep.subr.mxu0 0.0
    %299 = vmatpush1.msra.mxu0 %v245
    %300 = vmatprep.subr.mxu0 0.0
    %301 = vmatpush2.msra.mxu0 0.0
    %302 = vmatprep.subr.mxu0 0.0
    %303 = vmatpush2.msra.mxu0 0.0
    %304 = vmatprep.subr.mxu0 0.0
    %305 = vmatpush2.msra.mxu0 0.0
    %306 = vmatprep.subr.mxu0 0.0
    %307 = vmatpush2.msra.mxu0 0.0
    %308 = vmatprep.subr.mxu0 0.0
    %309 = vmatpush2.msra.mxu0 0.0
    %310 = vmatprep.subr.mxu0 0.0
    %311 = vmatpush2.msra.mxu0 0.0
    %312 = vmatprep.subr.mxu0 0.0
    %313 = vmatpush2.msra.mxu0 0.0
    %314 = vmatprep.subr.mxu0 0.0
    %315 = vmatpush2.msra.mxu0 0.0
    %316 = vmatprep.subr.mxu0 0.0
    %317 = vmatpush2.msra.mxu0 0.0
    %318 = vmatprep.subr.mxu0 0.0
    %319 = vmatpush2.msra.mxu0 0.0
    %320 = vmatprep.subr.mxu0 0.0
    %321 = vmatpush2.msra.mxu0 0.0
    %322 = vmatprep.subr.mxu0 0.0
    %323 = vmatpush2.msra.mxu0 0.0
    %324 = vmatprep.subr.mxu0 0.0
    %325 = vmatpush2.msra.mxu0 0.0
    %326 = vmatprep.subr.mxu0 0.0
    %327 = vmatpush2.msra.mxu0 0.0
    %328 = vmatprep.subr.mxu0 0.0
    %329 = vmatpush2.msra.mxu0 0.0
    %330 = vmatprep.subr.mxu0 0.0
    %331 = vmatpush2.msra.mxu0 0.0
    %332 = vmatprep.mubr.f32.mxu0 0.0
    %333 = vmatmul.mubr.f32.gmra.mxu0 %v243
    %v334 = vpop.f32.mrf.mxu0
    %v335 = vadd.f32 %v266, %v334
    %v336 = vpop.f32.mrf.mxu0
    %337 = vmatprep.mubr.f32.mxu0 0.0
    %338 = vmatmul.mubr.f32.gmra.mxu0 %v244
    %v339 = vpop.f32.mrf.mxu0
    %v340 = vadd.f32 %v266, %v339
    %v341 = vpop.f32.mrf.mxu0
    %342 = vdwg.mxu0
    %v343 = vadd.f32 %v143, %v335
    %v344 = vadd.f32 %v144, %v340
    %v345 = vld [vmem:[%s8] sm:$0x1]
    %v346 = vld [vmem:[%s9] sm:$0x1]
    %347 = vadd.xlane.f32.xlu0 %v343
    %v348 = vpop.xlane.xlu0 %347
    %349 = vadd.xlane.f32.xlu0 %v344
    %v350 = vpop.xlane.xlu0 %349
    %v351 = vmul.f32 %v348, %v108
    %v352 = vmul.f32 %v350, %v108
    %v353 = vsub.f32 %v343, %v351
    %v354 = vsub.f32 %v344, %v352
    %v355 = vmul.f32 %v353, %v101
    %v356 = vmul.f32 %v354, %v101
    %v357 = vmul.f32 %v355, %v355
    %v358 = vmul.f32 %v356, %v356
    %359 = vadd.xlane.f32.xlu0 %v357
    %v360 = vpop.xlane.xlu0 %359
    %361 = vadd.xlane.f32.xlu0 %v358
    %v362 = vpop.xlane.xlu0 %361
    %v363 = vmul.f32 %v360, %v108
    %v364 = vmul.f32 %v362, %v108
    %v365 = vadd.f32 %v363, 1e-05
    %v366 = vadd.f32 %v364, 1e-05
    %v367 = vrsqrt.pop %v365
    %v368 = vrsqrt.pop %v366
    %v369 = vmul.f32 %v355, %v367
    %v370 = vmul.f32 %v356, %v368
    %v372 = vlaneseq
    %v373 = vshrl.u32 %v372, 7
    %v374 = vsub.s32 0, %v373
    %v375 = vrot.slane %v345, %v374
    %v377 = vmul.f32 %v369, %v375
    %v378 = vmul.f32 %v370, %v375
    %v380 = vlaneseq
    %v381 = vshrl.u32 %v380, 7
    %v382 = vsub.s32 0, %v381
    %v383 = vrot.slane %v346, %v382
    %v385 = vadd.f32 %v377, %v383
    %v386 = vadd.f32 %v378, %v383
    %387 = vst [vmem:[#allocation10] sm:$0xff] %v385
    %388 = vst [vmem:[#allocation10 + $0x8] sm:$0xff] %v386
    // Predicated region
    $region58: #{tpu_custom_call.1} parent=1 // pred_check
      _
    $region59: #{tpu_custom_call.1} parent=1 // pred_check_branch
      %390 = sbr.rel (0) target = $region61
    $region60: #{tpu_custom_call.1} parent=1 // pred_region
      %s392 = ssub.s32 256, 256
      %393 = vsyncadd [#allocation4], %s392
      %s394 = sshll.u32 [#allocation10], 4
      %s395 = int_to_ptr.vmem [resolvable:$true] %s394
      %400 = dma.vmem_to_hbm [thread:$0]  %s395, 256, %s10, [#allocation4], 128, 128, 8
    $region61: #{tpu_custom_call.1} parent=1 // pred_fallthru
      _
    // Predicated region
    $region62: #{tpu_custom_call.1} parent=1 // pred_check
      _
    $region63: #{tpu_custom_call.1} parent=1 // pred_check_branch
      %402 = sbr.rel (0) target = $region65
    $region64: #{tpu_custom_call.1} parent=1 // pred_region
      %403 = dma.done [#allocation4], 256
    $region65: #{tpu_custom_call.1} parent=1 // pred_fallthru
      _
    %404 = vsyncpa [#allocation3], 1
    %405 = vsyncpa [#allocation6], 1
    %406 = vsyncpa [#allocation9], 1
    %407 = vsyncpa [#allocation4], 1

// kernel: tpu_custom_call.1
$region0: #{tpu_custom_call.1}
  #allocation0 [shape = 'u32[]', space=smem, size = 0x4, offset = 0x4, fixed_abs, tag = 'smem constant byte address 0x4 - core index']
  #allocation1 [shape = 'u32[144,128]{1,0:T(1,128)}', space=vmem, size = 0x12000, scoped, tag = 'internal scratch']
  %s0 = inlined_call_operand.hbm [shape: f32[16,128], index: 0, kind: input, shape index: {}]
  %s1 = inlined_call_operand.hbm [shape: f32[16,128], index: 1, kind: input, shape index: {}]
  %s2 = inlined_call_operand.hbm [shape: f32[128,128], index: 2, kind: input, shape index: {}]
  %s3 = inlined_call_operand.vmem [shape: f32[1,128], index: 3, kind: input, shape index: {}]
  %s4 = inlined_call_operand.hbm [shape: f32[128,128], index: 4, kind: input, shape index: {}]
  %s5 = inlined_call_operand.vmem [shape: f32[1,128], index: 5, kind: input, shape index: {}]
  %s6 = inlined_call_operand.vmem [shape: f32[1,128], index: 6, kind: input, shape index: {}]
  %s7 = inlined_call_operand.vmem [shape: f32[1,128], index: 7, kind: input, shape index: {}]
  %s8 = inlined_call_operand.vmem [shape: f32[1,128], index: 8, kind: input, shape index: {}]
  %s9 = inlined_call_operand.vmem [shape: f32[1,128], index: 9, kind: input, shape index: {}]
  %s10 = inlined_call_operand.hbm [shape: f32[16,128], index: 10, kind: output, shape index: {}]
  %s11 = sld [smem:[#allocation0]]
  $region66: #{tpu_custom_call.1} parent=0
    _
  %s13 = ssub.s32 1, %s11
  %s14 = scalar_select 0, %s13, %s11
  $region1: #{tpu_custom_call.1} parent=0
    #allocation2 [shape = 'u8[8192]{0}', space=vmem, size = 0x2000, scoped, tag = 'input window, operand 0, single buffered']
    #allocation3 [shape = 's32[1]{0}', space=sflag, size = 0x4, scoped, tag = 'scoped memory for tpu_custom_call.1']
    #allocation4 [shape = 's32[1]{0}', space=sflag, size = 0x4, scoped, tag = 'scoped memory for tpu_custom_call.1']
    #allocation5 [shape = 'u8[8192]{0}', space=vmem, size = 0x2000, scoped, tag = 'input window, operand 1, single buffered']
    #allocation6 [shape = 's32[1]{0}', space=sflag, size = 0x4, scoped, tag = 'scoped memory for tpu_custom_call.1']
    #allocation7 [shape = 'u8[65536]{0}', space=vmem, size = 0x10000, scoped, tag = 'input window, operand 2, single buffered']
    #allocation8 [shape = 'u8[65536]{0}', space=vmem, size = 0x10000, scoped, tag = 'input window, operand 4, single buffered']
    #allocation9 [shape = 's32[1]{0}', space=sflag, size = 0x4, scoped, tag = 'scoped memory for tpu_custom_call.1']
    #allocation10 [shape = 'u8[8192]{0}', space=vmem, size = 0x2000, scoped, tag = 'output window, operand 0, single buffered']
    %15 = vsyncpa [#allocation3], 0
    %16 = vsyncpa [#allocation6], 0
    %17 = vsyncpa [#allocation9], 0
    %18 = vsyncpa [#allocation4], 0
    // Predicated region
    $region2: #{tpu_custom_call.1} parent=1 // pred_check
      _
    $region3: #{tpu_custom_call.1} parent=1 // pred_check_branch
      %20 = sbr.rel (0) target = $region5
    $region4: #{tpu_custom_call.1} parent=1 // pred_region
      %s22 = ssub.s32 256, 256
      %23 = vsyncadd [#allocation3], %s22
      %s24 = sshll.u32 [#allocation2], 4
      %s25 = int_to_ptr.vmem [resolvable:$true] %s24
      %30 = dma.hbm_to_vmem [thread:$0]  %s0, 256, %s25, [#allocation3], 128, 128, 8
    $region5: #{tpu_custom_call.1} parent=1 // pred_fallthru
      _
    // Predicated region
    $region6: #{tpu_custom_call.1} parent=1 // pred_check
      _
    $region7: #{tpu_custom_call.1} parent=1 // pred_check_branch
      %32 = sbr.rel (0) target = $region9
    $region8: #{tpu_custom_call.1} parent=1 // pred_region
      %s34 = ssub.s32 256, 256
      %35 = vsyncadd [#allocation6], %s34
      %s36 = sshll.u32 [#allocation5], 4
      %s37 = int_to_ptr.vmem [resolvable:$true] %s36
      %42 = dma.hbm_to_vmem [thread:$0]  %s1, 256, %s37, [#allocation6], 128, 128, 8
    $region9: #{tpu_custom_call.1} parent=1 // pred_fallthru
      _
    // Predicated region
    $region10: #{tpu_custom_call.1} parent=1 // pred_check
      _
    $region11: #{tpu_custom_call.1} parent=1 // pred_check_branch
      %44 = sbr.rel (0) target = $region13
    $region12: #{tpu_custom_call.1} parent=1 // pred_region
      %s46 = ssub.s32 2048, 2048
      %47 = vsyncadd [#allocation6], %s46
      %s48 = sshll.u32 [#allocation7], 4
      %s49 = int_to_ptr.vmem [resolvable:$true] %s48
      %54 = dma.hbm_to_vmem [thread:$0]  %s2, 2048, %s49, [#allocation6], 128, 128, 8
    $region13: #{tpu_custom_call.1} parent=1 // pred_fallthru
      _
    // Predicated region
    $region14: #{tpu_custom_call.1} parent=1 // pred_check
      _
    $region15: #{tpu_custom_call.1} parent=1 // pred_check_branch
      %56 = sbr.rel (0) target = $region17
    $region16: #{tpu_custom_call.1} parent=1 // pred_region
      _
    $region17: #{tpu_custom_call.1} parent=1 // pred_fallthru
      _
    // Predicated region
    $region18: #{tpu_custom_call.1} parent=1 // pred_check
      _
    $region19: #{tpu_custom_call.1} parent=1 // pred_check_branch
      %58 = sbr.rel (0) target = $region21
    $region20: #{tpu_custom_call.1} parent=1 // pred_region
      %s60 = ssub.s32 2048, 2048
      %61 = vsyncadd [#allocation9], %s60
      %s62 = sshll.u32 [#allocation8], 4
      %s63 = int_to_ptr.vmem [resolvable:$true] %s62
      %68 = dma.hbm_to_vmem [thread:$0]  %s4, 2048, %s63, [#allocation9], 128, 128, 8
    $region21: #{tpu_custom_call.1} parent=1 // pred_fallthru
      _
    // Predicated region
    $region22: #{tpu_custom_call.1} parent=1 // pred_check
      _
    $region23: #{tpu_custom_call.1} parent=1 // pred_check_branch
      %70 = sbr.rel (0) target = $region25
    $region24: #{tpu_custom_call.1} parent=1 // pred_region
      _
    $region25: #{tpu_custom_call.1} parent=1 // pred_fallthru
      _
    // Predicated region
    $region26: #{tpu_custom_call.1} parent=1 // pred_check
      _
    $region27: #{tpu_custom_call.1} parent=1 // pred_check_branch
      %72 = sbr.rel (0) target = $region29
    $region28: #{tpu_custom_call.1} parent=1 // pred_region
      _
    $region29: #{tpu_custom_call.1} parent=1 // pred_fallthru
      _
    // Predicated region
    $region30: #{tpu_custom_call.1} parent=1 // pred_check
      _
    $region31: #{tpu_custom_call.1} parent=1 // pred_check_branch
      %74 = sbr.rel (0) target = $region33
    $region32: #{tpu_custom_call.1} parent=1 // pred_region
      _
    $region33: #{tpu_custom_call.1} parent=1 // pred_fallthru
      _
    // Predicated region
    $region34: #{tpu_custom_call.1} parent=1 // pred_check
      _
    $region35: #{tpu_custom_call.1} parent=1 // pred_check_branch
      %76 = sbr.rel (0) target = $region37
    $region36: #{tpu_custom_call.1} parent=1 // pred_region
      _
    $region37: #{tpu_custom_call.1} parent=1 // pred_fallthru
      _
    // Predicated region
    $region38: #{tpu_custom_call.1} parent=1 // pred_check
      _
    $region39: #{tpu_custom_call.1} parent=1 // pred_check_branch
      %78 = sbr.rel (0) target = $region41
    $region40: #{tpu_custom_call.1} parent=1 // pred_region
      _
    $region41: #{tpu_custom_call.1} parent=1 // pred_fallthru
      _
    // Predicated region
    $region42: #{tpu_custom_call.1} parent=1 // pred_check
      _
    $region43: #{tpu_custom_call.1} parent=1 // pred_check_branch
      %80 = sbr.rel (0) target = $region45
    $region44: #{tpu_custom_call.1} parent=1 // pred_region
      %81 = dma.done [#allocation3], 256
    $region45: #{tpu_custom_call.1} parent=1 // pred_fallthru
      _
    // Predicated region
    $region46: #{tpu_custom_call.1} parent=1 // pred_check
      _
    $region47: #{tpu_custom_call.1} parent=1 // pred_check_branch
      %83 = sbr.rel (0) target = $region49
    $region48: #{tpu_custom_call.1} parent=1 // pred_region
      %84 = dma.done [#allocation6], 256
    $region49: #{tpu_custom_call.1} parent=1 // pred_fallthru
      _
    // Predicated region
    $region50: #{tpu_custom_call.1} parent=1 // pred_check
      _
    $region51: #{tpu_custom_call.1} parent=1 // pred_check_branch
      %86 = sbr.rel (0) target = $region53
    $region52: #{tpu_custom_call.1} parent=1 // pred_region
      %87 = dma.done [#allocation6], 2048
    $region53: #{tpu_custom_call.1} parent=1 // pred_fallthru
      _
    // Predicated region
    $region54: #{tpu_custom_call.1} parent=1 // pred_check
      _
    $region55: #{tpu_custom_call.1} parent=1 // pred_check_branch
      %89 = sbr.rel (0) target = $region57
    $region56: #{tpu_custom_call.1} parent=1 // pred_region
      %90 = dma.done [#allocation9], 2048
    $region57: #{tpu_custom_call.1} parent=1 // pred_fallthru
      _
    %v91 = vld [vmem:[#allocation2] sm:$0xff]
    %v92 = vld [vmem:[#allocation2 + $0x8] sm:$0xff]
    %v93 = vld [vmem:[#allocation5] sm:$0xff]
    %v94 = vld [vmem:[#allocation5 + $0x8] sm:$0xff]
    %v95 = vadd.f32 %v91, %v93
    %v96 = vadd.f32 %v92, %v94
    %v97 = vlaneseq
    %v98 = vand.u32 %v97, 127
    %vm99 = vcmp.lt.s32.totalorder %v98, 32
    %v100 = vsel %vm99, 1, 0
    %v101 = vcvt.s32.f32 %v100
    %v102 = vld [vmem:[%s6] sm:$0x1]
    %v103 = vld [vmem:[%s7] sm:$0x1]
    %104 = vadd.xlane.f32.xlu0 %v95
    %v105 = vpop.xlane.xlu0 %104
    %106 = vadd.xlane.f32.xlu0 %v96
    %v107 = vpop.xlane.xlu0 %106
    %v108 = vrcp.pop 32.0
    %v109 = vmul.f32 %v105, %v108
    %v110 = vmul.f32 %v107, %v108
    %v111 = vsub.f32 %v95, %v109
    %v112 = vsub.f32 %v96, %v110
    %v113 = vmul.f32 %v111, %v101
    %v114 = vmul.f32 %v112, %v101
    %v115 = vmul.f32 %v113, %v113
    %v116 = vmul.f32 %v114, %v114
    %117 = vadd.xlane.f32.xlu0 %v115
    %v118 = vpop.xlane.xlu0 %117
    %119 = vadd.xlane.f32.xlu0 %v116
    %v120 = vpop.xlane.xlu0 %119
    %v121 = vmul.f32 %v118, %v108
    %v122 = vmul.f32 %v120, %v108
    %v123 = vadd.f32 %v121, 1e-05
    %v124 = vadd.f32 %v122, 1e-05
    %v125 = vrsqrt.pop %v123
    %v126 = vrsqrt.pop %v124
    %v127 = vmul.f32 %v113, %v125
    %v128 = vmul.f32 %v114, %v126
    %v130 = vlaneseq
    %v131 = vshrl.u32 %v130, 7
    %v132 = vsub.s32 0, %v131
    %v133 = vrot.slane %v102, %v132
    %v135 = vmul.f32 %v127, %v133
    %v136 = vmul.f32 %v128, %v133
    %v138 = vlaneseq
    %v139 = vshrl.u32 %v138, 7
    %v140 = vsub.s32 0, %v139
    %v141 = vrot.slane %v103, %v140
    %v143 = vadd.f32 %v135, %v141
    %v144 = vadd.f32 %v136, %v141
    %v145 = vld [vmem:[#allocation7] sm:$0xff]
    %v146 = vld [vmem:[#allocation7 + $0x8] sm:$0xff]
    %v147 = vld [vmem:[#allocation7 + $0x10] sm:$0xff]
    %v148 = vld [vmem:[#allocation7 + $0x18] sm:$0xff]
    %v149 = vld [vmem:[#allocation7 + $0x20] sm:$0xff]
    %v150 = vld [vmem:[#allocation7 + $0x28] sm:$0xff]
    %v151 = vld [vmem:[#allocation7 + $0x30] sm:$0xff]
    %v152 = vld [vmem:[#allocation7 + $0x38] sm:$0xff]
    %v153 = vld [vmem:[#allocation7 + $0x40] sm:$0xff]
    %v154 = vld [vmem:[#allocation7 + $0x48] sm:$0xff]
    %v155 = vld [vmem:[#allocation7 + $0x50] sm:$0xff]
    %v156 = vld [vmem:[#allocation7 + $0x58] sm:$0xff]
    %v157 = vld [vmem:[#allocation7 + $0x60] sm:$0xff]
    %v158 = vld [vmem:[#allocation7 + $0x68] sm:$0xff]
    %v159 = vld [vmem:[#allocation7 + $0x70] sm:$0xff]
    %v160 = vld [vmem:[#allocation7 + $0x78] sm:$0xff]
    %v161 = vld [vmem:[%s3] sm:$0x1]
    %v163 = vlaneseq
    %v164 = vshrl.u32 %v163, 7
    %v165 = vsub.s32 0, %v164
    %v166 = vrot.slane %v161, %v165
    %168 = vmatprep.subr.mxu0 0.0
    %169 = vmatpush1.msra.mxu0 %v160
    %170 = vmatprep.subr.mxu0 0.0
    %171 = vmatpush1.msra.mxu0 %v159
    %172 = vmatprep.subr.mxu0 0.0
    %173 = vmatpush1.msra.mxu0 %v158
    %174 = vmatprep.subr.mxu0 0.0
    %175 = vmatpush1.msra.mxu0 %v157
    %176 = vmatprep.subr.mxu0 0.0
    %177 = vmatpush1.msra.mxu0 %v156
    %178 = vmatprep.subr.mxu0 0.0
    %179 = vmatpush1.msra.mxu0 %v155
    %180 = vmatprep.subr.mxu0 0.0
    %181 = vmatpush1.msra.mxu0 %v154
    %182 = vmatprep.subr.mxu0 0.0
    %183 = vmatpush1.msra.mxu0 %v153
    %184 = vmatprep.subr.mxu0 0.0
    %185 = vmatpush1.msra.mxu0 %v152
    %186 = vmatprep.subr.mxu0 0.0
    %187 = vmatpush1.msra.mxu0 %v151
    %188 = vmatprep.subr.mxu0 0.0
    %189 = vmatpush1.msra.mxu0 %v150
    %190 = vmatprep.subr.mxu0 0.0
    %191 = vmatpush1.msra.mxu0 %v149
    %192 = vmatprep.subr.mxu0 0.0
    %193 = vmatpush1.msra.mxu0 %v148
    %194 = vmatprep.subr.mxu0 0.0
    %195 = vmatpush1.msra.mxu0 %v147
    %196 = vmatprep.subr.mxu0 0.0
    %197 = vmatpush1.msra.mxu0 %v146
    %198 = vmatprep.subr.mxu0 0.0
    %199 = vmatpush1.msra.mxu0 %v145
    %200 = vmatprep.subr.mxu0 0.0
    %201 = vmatpush2.msra.mxu0 0.0
    %202 = vmatprep.subr.mxu0 0.0
    %203 = vmatpush2.msra.mxu0 0.0
    %204 = vmatprep.subr.mxu0 0.0
    %205 = vmatpush2.msra.mxu0 0.0
    %206 = vmatprep.subr.mxu0 0.0
    %207 = vmatpush2.msra.mxu0 0.0
    %208 = vmatprep.subr.mxu0 0.0
    %209 = vmatpush2.msra.mxu0 0.0
    %210 = vmatprep.subr.mxu0 0.0
    %211 = vmatpush2.msra.mxu0 0.0
    %212 = vmatprep.subr.mxu0 0.0
    %213 = vmatpush2.msra.mxu0 0.0
    %214 = vmatprep.subr.mxu0 0.0
    %215 = vmatpush2.msra.mxu0 0.0
    %216 = vmatprep.subr.mxu0 0.0
    %217 = vmatpush2.msra.mxu0 0.0
    %218 = vmatprep.subr.mxu0 0.0
    %219 = vmatpush2.msra.mxu0 0.0
    %220 = vmatprep.subr.mxu0 0.0
    %221 = vmatpush2.msra.mxu0 0.0
    %222 = vmatprep.subr.mxu0 0.0
    %223 = vmatpush2.msra.mxu0 0.0
    %224 = vmatprep.subr.mxu0 0.0
    %225 = vmatpush2.msra.mxu0 0.0
    %226 = vmatprep.subr.mxu0 0.0
    %227 = vmatpush2.msra.mxu0 0.0
    %228 = vmatprep.subr.mxu0 0.0
    %229 = vmatpush2.msra.mxu0 0.0
    %230 = vmatprep.subr.mxu0 0.0
    %231 = vmatpush2.msra.mxu0 0.0
    %232 = vmatprep.mubr.f32.mxu0 0.0
    %233 = vmatmul.mubr.f32.gmra.mxu0 %v143
    %v234 = vpop.f32.mrf.mxu0
    %v235 = vadd.f32 %v166, %v234
    %v236 = vpop.f32.mrf.mxu0
    %237 = vmatprep.mubr.f32.mxu0 0.0
    %238 = vmatmul.mubr.f32.gmra.mxu0 %v144
    %v239 = vpop.f32.mrf.mxu0
    %v240 = vadd.f32 %v166, %v239
    %v241 = vpop.f32.mrf.mxu0
    %242 = vdwg.mxu0
    %v243 = vmax.f32 %v235, 0.0
    %v244 = vmax.f32 %v240, 0.0
    %v245 = vld [vmem:[#allocation8] sm:$0xff]
    %v246 = vld [vmem:[#allocation8 + $0x8] sm:$0xff]
    %v247 = vld [vmem:[#allocation8 + $0x10] sm:$0xff]
    %v248 = vld [vmem:[#allocation8 + $0x18] sm:$0xff]
    %v249 = vld [vmem:[#allocation8 + $0x20] sm:$0xff]
    %v250 = vld [vmem:[#allocation8 + $0x28] sm:$0xff]
    %v251 = vld [vmem:[#allocation8 + $0x30] sm:$0xff]
    %v252 = vld [vmem:[#allocation8 + $0x38] sm:$0xff]
    %v253 = vld [vmem:[#allocation8 + $0x40] sm:$0xff]
    %v254 = vld [vmem:[#allocation8 + $0x48] sm:$0xff]
    %v255 = vld [vmem:[#allocation8 + $0x50] sm:$0xff]
    %v256 = vld [vmem:[#allocation8 + $0x58] sm:$0xff]
    %v257 = vld [vmem:[#allocation8 + $0x60] sm:$0xff]
    %v258 = vld [vmem:[#allocation8 + $0x68] sm:$0xff]
    %v259 = vld [vmem:[#allocation8 + $0x70] sm:$0xff]
    %v260 = vld [vmem:[#allocation8 + $0x78] sm:$0xff]
    %v261 = vld [vmem:[%s5] sm:$0x1]
    %v263 = vlaneseq
    %v264 = vshrl.u32 %v263, 7
    %v265 = vsub.s32 0, %v264
    %v266 = vrot.slane %v261, %v265
    %268 = vmatprep.subr.mxu0 0.0
    %269 = vmatpush1.msra.mxu0 %v260
    %270 = vmatprep.subr.mxu0 0.0
    %271 = vmatpush1.msra.mxu0 %v259
    %272 = vmatprep.subr.mxu0 0.0
    %273 = vmatpush1.msra.mxu0 %v258
    %274 = vmatprep.subr.mxu0 0.0
    %275 = vmatpush1.msra.mxu0 %v257
    %276 = vmatprep.subr.mxu0 0.0
    %277 = vmatpush1.msra.mxu0 %v256
    %278 = vmatprep.subr.mxu0 0.0
    %279 = vmatpush1.msra.mxu0 %v255
    %280 = vmatprep.subr.mxu0 0.0
    %281 = vmatpush1.msra.mxu0 %v254
    %282 = vmatprep.subr.mxu0 0.0
    %283 = vmatpush1.msra.mxu0 %v253
    %284 = vmatprep.subr.mxu0 0.0
    %285 = vmatpush1.msra.mxu0 %v252
    %286 = vmatprep.subr.mxu0 0.0
    %287 = vmatpush1.msra.mxu0 %v251
    %288 = vmatprep.subr.mxu0 0.0
    %289 = vmatpush1.msra.mxu0 %v250
    %290 = vmatprep.subr.mxu0 0.0
    %291 = vmatpush1.msra.mxu0 %v249
    %292 = vmatprep.subr.mxu0 0.0
    %293 = vmatpush1.msra.mxu0 %v248
    %294 = vmatprep.subr.mxu0 0.0
    %295 = vmatpush1.msra.mxu0 %v247
    %296 = vmatprep.subr.mxu0 0.0
    %297 = vmatpush1.msra.mxu0 %v246
    %298 = vmatprep.subr.mxu0 0.0
    %299 = vmatpush1.msra.mxu0 %v245
    %300 = vmatprep.subr.mxu0 0.0
    %301 = vmatpush2.msra.mxu0 0.0
    %302 = vmatprep.subr.mxu0 0.0
    %303 = vmatpush2.msra.mxu0 0.0
    %304 = vmatprep.subr.mxu0 0.0
    %305 = vmatpush2.msra.mxu0 0.0
    %306 = vmatprep.subr.mxu0 0.0
    %307 = vmatpush2.msra.mxu0 0.0
    %308 = vmatprep.subr.mxu0 0.0
    %309 = vmatpush2.msra.mxu0 0.0
    %310 = vmatprep.subr.mxu0 0.0
    %311 = vmatpush2.msra.mxu0 0.0
    %312 = vmatprep.subr.mxu0 0.0
    %313 = vmatpush2.msra.mxu0 0.0
    %314 = vmatprep.subr.mxu0 0.0
    %315 = vmatpush2.msra.mxu0 0.0
    %316 = vmatprep.subr.mxu0 0.0
    %317 = vmatpush2.msra.mxu0 0.0
    %318 = vmatprep.subr.mxu0 0.0
    %319 = vmatpush2.msra.mxu0 0.0
    %320 = vmatprep.subr.mxu0 0.0
    %321 = vmatpush2.msra.mxu0 0.0
    %322 = vmatprep.subr.mxu0 0.0
    %323 = vmatpush2.msra.mxu0 0.0
    %324 = vmatprep.subr.mxu0 0.0
    %325 = vmatpush2.msra.mxu0 0.0
    %326 = vmatprep.subr.mxu0 0.0
    %327 = vmatpush2.msra.mxu0 0.0
    %328 = vmatprep.subr.mxu0 0.0
    %329 = vmatpush2.msra.mxu0 0.0
    %330 = vmatprep.subr.mxu0 0.0
    %331 = vmatpush2.msra.mxu0 0.0
    %332 = vmatprep.mubr.f32.mxu0 0.0
    %333 = vmatmul.mubr.f32.gmra.mxu0 %v243
    %v334 = vpop.f32.mrf.mxu0
    %v335 = vadd.f32 %v266, %v334
    %v336 = vpop.f32.mrf.mxu0
    %337 = vmatprep.mubr.f32.mxu0 0.0
    %338 = vmatmul.mubr.f32.gmra.mxu0 %v244
    %v339 = vpop.f32.mrf.mxu0
    %v340 = vadd.f32 %v266, %v339
    %v341 = vpop.f32.mrf.mxu0
    %342 = vdwg.mxu0
    %v343 = vadd.f32 %v143, %v335
    %v344 = vadd.f32 %v144, %v340
    %v345 = vld [vmem:[%s8] sm:$0x1]
    %v346 = vld [vmem:[%s9] sm:$0x1]
    %347 = vadd.xlane.f32.xlu0 %v343
    %v348 = vpop.xlane.xlu0 %347
    %349 = vadd.xlane.f32.xlu0 %v344
    %v350 = vpop.xlane.xlu0 %349
    %v351 = vmul.f32 %v348, %v108
    %v352 = vmul.f32 %v350, %v108
    %v353 = vsub.f32 %v343, %v351
    %v354 = vsub.f32 %v344, %v352
    %v355 = vmul.f32 %v353, %v101
    %v356 = vmul.f32 %v354, %v101
    %v357 = vmul.f32 %v355, %v355
    %v358 = vmul.f32 %v356, %v356
    %359 = vadd.xlane.f32.xlu0 %v357
    %v360 = vpop.xlane.xlu0 %359
    %361 = vadd.xlane.f32.xlu0 %v358
    %v362 = vpop.xlane.xlu0 %361
    %v363 = vmul.f32 %v360, %v108
    %v364 = vmul.f32 %v362, %v108
    %v365 = vadd.f32 %v363, 1e-05
    %v366 = vadd.f32 %v364, 1e-05
    %v367 = vrsqrt.pop %v365
    %v368 = vrsqrt.pop %v366
    %v369 = vmul.f32 %v355, %v367
    %v370 = vmul.f32 %v356, %v368
    %v372 = vlaneseq
    %v373 = vshrl.u32 %v372, 7
    %v374 = vsub.s32 0, %v373
    %v375 = vrot.slane %v345, %v374
    %v377 = vmul.f32 %v369, %v375
    %v378 = vmul.f32 %v370, %v375
    %v380 = vlaneseq
    %v381 = vshrl.u32 %v380, 7
    %v382 = vsub.s32 0, %v381
    %v383 = vrot.slane %v346, %v382
    %v385 = vadd.f32 %v377, %v383
    %v386 = vadd.f32 %v378, %v383
    %387 = vst [vmem:[#allocation10] sm:$0xff] %v385
    %388 = vst [vmem:[#allocation10 + $0x8] sm:$0xff] %v386
    // Predicated region
    $region58: #{tpu_custom_call.1} parent=1 // pred_check
      _
    $region59: #{tpu_custom_call.1} parent=1 // pred_check_branch
      %390 = sbr.rel (0) target = $region61
    $region60: #{tpu_custom_call.1} parent=1 // pred_region
      %s392 = ssub.s32 256, 256
      %393 = vsyncadd [#allocation4], %s392
      %s394 = sshll.u32 [#allocation10], 4
      %s395 = int_to_ptr.vmem [resolvable:$true] %s394
      %400 = dma.vmem_to_hbm [thread:$0]  %s395, 256, %s10, [#allocation4], 128, 128, 8
    $region61: #{tpu_custom_call.1} parent=1 // pred_fallthru
      _
    // Predicated region
    $region62: #{tpu_custom_call.1} parent=1 // pred_check
      _
    $region63: #{tpu_custom_call.1} parent=1 // pred_check_branch
      %402 = sbr.rel (0) target = $region65
    $region64: #{tpu_custom_call.1} parent=1 // pred_region
      %403 = dma.done [#allocation4], 256
    $region65: #{tpu_custom_call.1} parent=1 // pred_fallthru
      _
    %404 = vsyncpa [#allocation3], 1
    %405 = vsyncpa [#allocation6], 1
    %406 = vsyncpa [#allocation9], 1
    %407 = vsyncpa [#allocation4], 1

</llo_original>
